<compile_context>
chip_gen: v7x
topology: tpu7x:2x2x1
jax: 0.10.0
libtpu: 0.0.40
codegen_flags: <defaults>
</compile_context>

<pallas_src>
import functools

import jax
import jax.numpy as jnp
from jax import lax
from jax.experimental import pallas as pl
from jax.experimental.pallas import tpu as pltpu


# ---------------------------------------------------------------------------
# Budgeting helpers
# ---------------------------------------------------------------------------
def _vmem_capacity_bytes():
    """Physical per-core VMEM (128 MiB on v5e/v6e, 64 MiB per TC on v7x)."""
    try:
        info = pltpu.get_tpu_info()
        cap = int(getattr(info, "vmem_capacity_bytes", 0) or 0)
        if cap > 0:
            return cap
    except Exception:
        pass
    return 64 * 1024 * 1024  # conservative default = v7x per-TensorCore


def _pick_row_block(C, max_rows=256):
    """Row block for building P: bounds softmax temporaries to O(row_blk * C)."""
    if C <= max_rows:
        return C
    for r in range(max_rows, 7, -8):
        if C % r == 0:
            return r
    return C


def _pick_hw_tile(HW, budget_bytes, bytes_per_col):
    """Largest legal HW tile.

    Full HW when it fits the budget (=> a single HBM pass over x, since the
    phase-2 block index then equals the phase-1 index and Pallas keeps the
    block resident).  Otherwise the largest multiple of 256 (MXU width on
    v6e/v7x), then 128, that divides HW and fits the budget.
    """
    if HW % 128 != 0 or bytes_per_col * HW <= budget_bytes:
        return HW
    cols_max = budget_bytes // bytes_per_col
    for mult in (256, 128):
        cand = [t for t in range(mult, HW, mult) if HW % t == 0 and t <= cols_max]
        if cand:
            return max(cand)
    return 128  # smallest legal tile; vmem_limit is already near physical


# ---------------------------------------------------------------------------
# In-kernel helpers
# ---------------------------------------------------------------------------
def _build_p_rows(read_attn_block, write_p_block, C, row_blk, alpha):
    """alpha * softmax(rowmax(attn)-attn) == alpha * exp(rowmin(attn)-attn)/sum,
    built row_blk rows at a time so peak VMEM temporaries stay O(row_blk * C)."""

    def one(start):
        attn = read_attn_block(start)                            # (row_blk, C)
        p = jnp.exp(jnp.min(attn, axis=-1, keepdims=True) - attn)
        p = p * pl.reciprocal(jnp.sum(p, axis=-1, keepdims=True), approx=False)
        write_p_block(start, alpha * p)

    n_blk = C // row_blk
    if n_blk <= 1:
        one(0)
    else:
        def body(r, carry):
            one(pl.multiple_of(r * row_blk, row_blk))
            return carry

        lax.fori_loop(0, n_blk, body, 0)


# ---------------------------------------------------------------------------
# Fast path: fre spatially constant (the FDLNet case, fre = (B, C, 1, 1)).
# ---------------------------------------------------------------------------
def _freq_attn_kernel_rank1(alpha_ref, x_ref, f_ref, o_ref, s_acc, p_scr,
                            *, row_blk, mxu_dtype):
    t = pl.program_id(1)
    num_t = pl.num_programs(1) // 2            # number of HW tiles
    C = s_acc.shape[0]

    a = x_ref[0]                               # (C, thw)

    # ---- phase 1: s = rowsum_HW(A), accumulated across HW tiles ------------
    @pl.when(t == 0)
    def _():
        s_acc[...] = jnp.zeros_like(s_acc)

    @pl.when(t < num_t)
    def _():
        s_acc[...] += jnp.sum(a, axis=-1, keepdims=True)

    # ---- phase 2 entry: P = alpha * softmax(-(s f^T)), row-tiled ------------
    @pl.when(t == num_t)
    def _():
        f = f_ref[0]                           # (1, C)
        alpha = alpha_ref[0, 0]

        def read(start):                       # rank-1 outer product rows
            return s_acc[pl.ds(start, row_blk), :] * f

        def write(start, val):
            p_scr[pl.ds(start, row_blk), :] = val

        _build_p_rows(read, write, C, row_blk, alpha)

    # ---- phase 2: out_tile = (alpha*P) @ A_tile + A_tile --------------------
    @pl.when(t >= num_t)
    def _():
        p = p_scr[...]
        o_ref[0] = (jnp.dot(p.astype(mxu_dtype), a.astype(mxu_dtype),
                            preferred_element_type=jnp.float32)
                    + a).astype(o_ref.dtype)


# ---------------------------------------------------------------------------
# General path: fre varies spatially (attn accumulated over HW tiles).
# ---------------------------------------------------------------------------
def _freq_attn_kernel_general(alpha_ref, x_ref, ft_ref, o_ref, attn_acc,
                              *, row_blk, mxu_dtype):
    t = pl.program_id(1)
    num_t = pl.num_programs(1) // 2
    C = attn_acc.shape[0]

    a = x_ref[0]                               # (C, thw)

    @pl.when(t == 0)
    def _():
        attn_acc[...] = jnp.zeros_like(attn_acc)

    @pl.when(t < num_t)
    def _():
        ft = ft_ref[0]                         # (thw, C): fre pre-transposed
        attn_acc[...] += jnp.dot(a.astype(mxu_dtype), ft.astype(mxu_dtype),
                                 preferred_element_type=jnp.float32)

    # attn_acc is dead after this step; overwrite it in place with alpha * P.
    @pl.when(t == num_t)
    def _():
        alpha = alpha_ref[0, 0]

        def read(start):
            return attn_acc[pl.ds(start, row_blk), :]

        def write(start, val):
            attn_acc[pl.ds(start, row_blk), :] = val

        _build_p_rows(read, write, C, row_blk, alpha)

    @pl.when(t >= num_t)
    def _():
        p = attn_acc[...]
        o_ref[0] = (jnp.dot(p.astype(mxu_dtype), a.astype(mxu_dtype),
                            preferred_element_type=jnp.float32)
                    + a).astype(o_ref.dtype)


# ---------------------------------------------------------------------------
# Wrapper
# ---------------------------------------------------------------------------
def freq_attention_module(x, fre, alpha, *, hw_tile=None, use_bf16_matmul=False,
                          donate_x=False):
    """Pallas TPU forward of _FreqAttentionModule.

    x:     (B, C, H, W) float32
    fre:   4-D, broadcastable to x (FDLNet passes (B, C, 1, 1))
    alpha: scalar parameter (torch init: zeros(1))
    use_bf16_matmul: cast MXU matmul inputs to bf16 (f32 accumulation); opt-in,
                     mainly for compute-bound shapes on v5e.
    donate_x: alias x to the output buffer (safe: every x tile is read before
              the corresponding out tile is written back).
    """
    x = jnp.asarray(x)
    B, C, H, W = x.shape
    HW = H * W

    fre = jnp.asarray(fre, dtype=x.dtype)
    if fre.ndim != 4:
        fre = fre.reshape((1,) * (4 - fre.ndim) + fre.shape)
    spatially_const = fre.shape[2] == 1 and fre.shape[3] == 1

    mxu_dtype = jnp.bfloat16 if use_bf16_matmul else jnp.float32
    row_blk = _pick_row_block(C)

    # --- per-generation VMEM budgeting (v5e/v6e: 128 MiB, v7x: 64 MiB/TC) ----
    cap = _vmem_capacity_bytes()
    vmem_limit = max(min(cap - (8 << 20), 100 << 20), 32 << 20)
    scratch_bytes = (C * 4 + C * C * 4) if spatially_const else (C * C * 4)
    tmp_bytes = 4 * row_blk * C * 4            # softmax temporaries headroom
    streams = 4 if spatially_const else 6      # double-buffered x + out (+ f)
    budget = max(vmem_limit - scratch_bytes - tmp_bytes - (4 << 20), 1 << 20)

    thw = hw_tile if hw_tile is not None else _pick_hw_tile(HW, budget, streams * C * 4)
    assert HW % thw == 0 and (thw == HW or thw % 128 == 0), "bad HW tile"
    num_t = HW // thw

    x_flat = x.reshape(B, C, HW)
    alpha_arr = jnp.asarray(alpha, dtype=jnp.float32).reshape(1, 1)

    # x: phase 1 reads tile t, phase 2 re-reads tile t - num_t.  When thw == HW
    # both phases resolve to the same block index -> single HBM pass over x.
    x_spec = pl.BlockSpec(
        (1, C, thw), lambda b, t: (b, 0, jnp.where(t < num_t, t, t - num_t)))
    # out: constant index during phase 1 (no spurious writebacks), tile-by-tile
    # during phase 2.
    out_spec = pl.BlockSpec(
        (1, C, thw), lambda b, t: (b, 0, jnp.where(t < num_t, 0, t - num_t)))

    if spatially_const:
        # Rank-1 fast path: never materialize the (B, C, HW) broadcast of fre.
        f_arg = jnp.broadcast_to(fre, (B, C, 1, 1)).reshape(B, 1, C)
        f_spec = pl.BlockSpec((1, 1, C), lambda b, t: (b, 0, 0))
        kernel = functools.partial(_freq_attn_kernel_rank1,
                                   row_blk=row_blk, mxu_dtype=mxu_dtype)
        scratch = [pltpu.VMEM((C, 1), jnp.float32),   # rowsum_HW(A)
                   pltpu.VMEM((C, C), jnp.float32)]   # alpha * P
    else:
        # Pre-transpose fre to (B, HW, C) in the wrapper so phase 1 is a plain
        # A @ F^T MXU matmul (no per-step in-kernel transpose on the XLU).
        f_arg = (jnp.broadcast_to(fre, x.shape)
                 .transpose(0, 2, 3, 1).reshape(B, HW, C))
        f_spec = pl.BlockSpec(
            (1, thw, C), lambda b, t: (b, jnp.where(t < num_t, t, num_t - 1), 0))
        kernel = functools.partial(_freq_attn_kernel_general,
                                   row_blk=row_blk, mxu_dtype=mxu_dtype)
        scratch = [pltpu.VMEM((C, C), jnp.float32)]   # attn, overwritten by alpha*P

    out_flat = pl.pallas_call(
        kernel,
        out_shape=jax.ShapeDtypeStruct((B, C, HW), x.dtype),
        grid_spec=pltpu.PrefetchScalarGridSpec(
            num_scalar_prefetch=0,
            grid=(B, 2 * num_t),
            in_specs=[
                pl.BlockSpec(memory_space=pltpu.SMEM),   # alpha scalar
                x_spec,
                f_spec,
            ],
            out_specs=out_spec,
            scratch_shapes=scratch,
        ),
        compiler_params=pltpu.CompilerParams(
            # TODO(synk): v7x megacore — with B == 1 only one TensorCore runs;
            # add a parallel C-row split of P/out for small-batch shapes.
            dimension_semantics=("parallel", "arbitrary"),
            vmem_limit_bytes=int(vmem_limit),
        ),
        input_output_aliases=({1: 0} if donate_x else {}),
    )(alpha_arr, x_flat, f_arg)

    return out_flat.reshape(B, C, H, W)


# ---------------------------------------------------------------------------
# Pure-JAX reference (mirrors the PyTorch module exactly).
# ---------------------------------------------------------------------------
def _reference(x, fre, alpha):
    B, C, H, W = x.shape
    HW = H * W
    fre_full = jnp.broadcast_to(fre, x.shape).astype(x.dtype)
    feat_a = x.reshape(B, C, HW)
    feat_f_t = jnp.transpose(fre_full.reshape(B, C, HW), (0, 2, 1))
    attention = jnp.einsum("bce,bef->bcf", feat_a, feat_f_t, precision="highest")
    attention_new = jnp.max(attention, axis=-1, keepdims=True) - attention
    attention = jax.nn.softmax(attention_new, axis=-1)
    feat_e = jnp.einsum("bcd,bde->bce", attention, feat_a,
                        precision="highest").reshape(B, C, H, W)
    return alpha * feat_e + x


if __name__ == "__main__":
    key = jax.random.PRNGKey(0)
    kx, kf, kg = jax.random.split(key, 3)

    B, C, H, W = 2, 8, 16, 16
    x = jax.random.normal(kx, (B, C, H, W), dtype=jnp.float32)
    fre = jax.random.normal(kf, (B, C, 1, 1), dtype=jnp.float32)       # FDLNet case
    fre_full = jax.random.normal(kg, (B, C, H, W), dtype=jnp.float32)  # general case

    # Slightly looser than 1e-4: the rank-1 refactor changes f32 summation order
    # (rowsum-then-scale vs matmul) relative to the reference einsum.
    tol = dict(atol=2e-4, rtol=2e-4)

    # 1) rank-1 fast path, auto tile (thw == HW here -> single HBM pass over x).
    for alpha_val in (0.0, 0.5):
        out = freq_attention_module(x, fre, jnp.float32(alpha_val))
        jax.block_until_ready(out)
        ref = _reference(x, fre, alpha_val)
        assert out.shape == (B, C, H, W)
        assert jnp.allclose(out, ref, **tol), f"rank-1 mismatch (alpha={alpha_val})"

    # 2) rank-1 path with forced HW tiling (exercises the two-phase pipeline).
    out = freq_attention_module(x, fre, jnp.float32(0.5), hw_tile=128)
    jax.block_until_ready(out)
    assert jnp.allclose(out, _reference(x, fre, 0.5), **tol), "tiled rank-1 mismatch"

    # 3) general path (fre varies spatially), HW-tiled.
    out = freq_attention_module(x, fre_full, jnp.float32(0.7), hw_tile=128)
    jax.block_until_ready(out)
    assert jnp.allclose(out, _reference(x, fre_full, 0.7), **tol), "general mismatch"

    # 4) general path, auto (single) tile.
    out = freq_attention_module(x, fre_full, jnp.float32(0.7))
    jax.block_until_ready(out)
    assert jnp.allclose(out, _reference(x, fre_full, 0.7), **tol), "general 1-tile mismatch"

    # 5) opt-in bf16 MXU mode (intended for compute-bound v5e shapes).
    out = freq_attention_module(x, fre, jnp.float32(0.7), use_bf16_matmul=True)
    jax.block_until_ready(out)
    assert jnp.allclose(out, _reference(x, fre, 0.7), atol=5e-2, rtol=5e-2), \
        "bf16 rank-1 mismatch"
    # General-path bf16: smoke test only (softmax over bf16 logits is
    # legitimately less accurate); just verify it compiles/runs and is finite.
    out = freq_attention_module(x, fre_full, jnp.float32(0.7), use_bf16_matmul=True)
    jax.block_until_ready(out)
    assert bool(jnp.all(jnp.isfinite(out))), "bf16 general produced non-finite values"

    print("KERNEL_OK")
</pallas_src>

<mosaic_0001>
module attributes {stable_mosaic.version = 11 : i64} {
  func.func @_freq_attn_kernel_rank1(%arg0: i32, %arg1: i32, %arg2: memref<1x1xf32, #tpu.memory_space<smem>>, %arg3: memref<1x8x256xf32, #tpu.memory_space<vmem>>, %arg4: memref<1x1x8xf32, #tpu.memory_space<vmem>>, %arg5: memref<1x8x256xf32, #tpu.memory_space<vmem>>, %arg6: memref<8x1xf32, #tpu.memory_space<vmem>>, %arg7: memref<8x8xf32, #tpu.memory_space<vmem>>) attributes {dimension_semantics = [#tpu.dimension_semantics<parallel>, #tpu.dimension_semantics<arbitrary>], iteration_bounds = array<i64: 2, 2>, scalar_prefetch = 0 : i64, scratch_operands = 2 : i64, tpu.core_type = #tpu.core_type<tc>, window_params = [{transform_indices = @transform_0, window_bounds = array<i64: 1, 1>}, {transform_indices = @transform_1, window_bounds = array<i64: 1, 8, 256>}, {transform_indices = @transform_2, window_bounds = array<i64: 1, 1, 8>}, {transform_indices = @transform_3, window_bounds = array<i64: 1, 8, 256>}]} {
    %c0 = arith.constant 0 : index
    %c0_0 = arith.constant 0 : index
    %c0_1 = arith.constant 0 : index
    %0 = vector.load %arg3[%c0, %c0_0, %c0_1] : memref<1x8x256xf32, #tpu.memory_space<vmem>>, vector<1x8x256xf32>
    %1 = vector.shape_cast %0 : vector<1x8x256xf32> to vector<8x256xf32>
    %c0_i32 = arith.constant 0 : i32
    %2 = arith.cmpi eq, %arg1, %c0_i32 : i32
    %3 = arith.extui %2 : i1 to i32
    %c0_i32_2 = arith.constant 0 : i32
    %4 = arith.cmpi ne, %3, %c0_i32_2 : i32
    scf.if %4 {
      %cst = arith.constant 0.000000e+00 : f32
      %14 = vector.broadcast %cst : f32 to vector<8x1xf32>
      %c0_8 = arith.constant 0 : index
      %c0_9 = arith.constant 0 : index
      %15 = vector.load %arg6[%c0_8, %c0_9] : memref<8x1xf32, #tpu.memory_space<vmem>>, vector<8x1xf32>
      tpu.vector_store %arg6[%c0_8, %c0_9], %14 {strides = array<i32>} : memref<8x1xf32, #tpu.memory_space<vmem>>, vector<8x1xf32>,
    } else {
    }
    %c1_i32 = arith.constant 1 : i32
    %5 = arith.cmpi slt, %arg1, %c1_i32 : i32
    %6 = arith.extui %5 : i1 to i32
    %c0_i32_3 = arith.constant 0 : i32
    %7 = arith.cmpi ne, %6, %c0_i32_3 : i32
    scf.if %7 {
      %c0_8 = arith.constant 0 : index
      %c0_9 = arith.constant 0 : index
      %14 = vector.load %arg6[%c0_8, %c0_9] : memref<8x1xf32, #tpu.memory_space<vmem>>, vector<8x1xf32>
      %cst = arith.constant dense<0.000000e+00> : vector<8xf32>
      %15 = vector.multi_reduction <add>, %1, %cst [1] : vector<8x256xf32> to vector<8xf32>
      %16 = vector.shape_cast %15 : vector<8xf32> to vector<8x1xf32>
      %17 = arith.addf %14, %16 : vector<8x1xf32>
      %c0_10 = arith.constant 0 : index
      %c0_11 = arith.constant 0 : index
      %18 = vector.load %arg6[%c0_10, %c0_11] : memref<8x1xf32, #tpu.memory_space<vmem>>, vector<8x1xf32>
      tpu.vector_store %arg6[%c0_10, %c0_11], %17 {strides = array<i32>} : memref<8x1xf32, #tpu.memory_space<vmem>>, vector<8x1xf32>,
    } else {
    }
    %c1_i32_4 = arith.constant 1 : i32
    %8 = arith.cmpi eq, %arg1, %c1_i32_4 : i32
    %9 = arith.extui %8 : i1 to i32
    %c0_i32_5 = arith.constant 0 : i32
    %10 = arith.cmpi ne, %9, %c0_i32_5 : i32
    scf.if %10 {
      %c0_8 = arith.constant 0 : index
      %c0_9 = arith.constant 0 : index
      %c0_10 = arith.constant 0 : index
      %14 = vector.load %arg4[%c0_8, %c0_9, %c0_10] : memref<1x1x8xf32, #tpu.memory_space<vmem>>, vector<1x1x8xf32>
      %15 = vector.shape_cast %14 : vector<1x1x8xf32> to vector<1x8xf32>
      %c0_11 = arith.constant 0 : index
      %c0_12 = arith.constant 0 : index
      %16 = memref.load %arg2[%c0_11, %c0_12] : memref<1x1xf32, #tpu.memory_space<smem>>
      %c0_13 = arith.constant 0 : index
      %c0_14 = arith.constant 0 : index
      %17 = vector.load %arg6[%c0_13, %c0_14] : memref<8x1xf32, #tpu.memory_space<vmem>>, vector<8x1xf32>
      %18 = vector.broadcast %17 : vector<8x1xf32> to vector<8x8xf32>
      %19 = vector.broadcast %15 : vector<1x8xf32> to vector<8x8xf32>
      %20 = arith.mulf %18, %19 : vector<8x8xf32>
      %cst = arith.constant dense<0x7F800000> : vector<8xf32>
      %21 = vector.multi_reduction <minimumf>, %20, %cst [1] : vector<8x8xf32> to vector<8xf32>
      %22 = vector.shape_cast %21 : vector<8xf32> to vector<8x1xf32>
      %23 = vector.broadcast %22 : vector<8x1xf32> to vector<8x8xf32>
      %24 = arith.subf %23, %20 : vector<8x8xf32>
      %25 = math.exp %24 : vector<8x8xf32>
      %cst_15 = arith.constant dense<0.000000e+00> : vector<8xf32>
      %26 = vector.multi_reduction <add>, %25, %cst_15 [1] : vector<8x8xf32> to vector<8xf32>
      %27 = vector.shape_cast %26 : vector<8xf32> to vector<8x1xf32>
      %28 = tpu.reciprocal %27 : vector<8x1xf32> -> vector<8x1xf32>
      %29 = vector.broadcast %28 : vector<8x1xf32> to vector<8x8xf32>
      %30 = arith.mulf %25, %29 : vector<8x8xf32>
      %31 = vector.broadcast %16 : f32 to vector<8x8xf32>
      %32 = arith.mulf %31, %30 : vector<8x8xf32>
      %c0_16 = arith.constant 0 : index
      %c0_17 = arith.constant 0 : index
      %33 = vector.load %arg7[%c0_16, %c0_17] : memref<8x8xf32, #tpu.memory_space<vmem>>, vector<8x8xf32>
      tpu.vector_store %arg7[%c0_16, %c0_17], %32 {strides = array<i32>} : memref<8x8xf32, #tpu.memory_space<vmem>>, vector<8x8xf32>,
    } else {
    }
    %c1_i32_6 = arith.constant 1 : i32
    %11 = arith.cmpi sge, %arg1, %c1_i32_6 : i32
    %12 = arith.extui %11 : i1 to i32
    %c0_i32_7 = arith.constant 0 : i32
    %13 = arith.cmpi ne, %12, %c0_i32_7 : i32
    scf.if %13 {
      %c0_8 = arith.constant 0 : index
      %c0_9 = arith.constant 0 : index
      %14 = vector.load %arg7[%c0_8, %c0_9] : memref<8x8xf32, #tpu.memory_space<vmem>>, vector<8x8xf32>
      %cst = arith.constant dense<0.000000e+00> : vector<8x256xf32>
      %15 = tpu.matmul %14, %1, %cst {dimension_numbers = #tpu.dot_dimension_numbers<[1], [0], [0], [1], [0, 0, 1, 1], [], []>} : vector<8x8xf32>, vector<8x256xf32>, vector<8x256xf32> -> vector<8x256xf32>
      %16 = arith.addf %15, %1 : vector<8x256xf32>
      %c0_10 = arith.constant 0 : index
      %c0_11 = arith.constant 0 : index
      %c0_12 = arith.constant 0 : index
      %17 = vector.load %arg5[%c0_10, %c0_11, %c0_12] : memref<1x8x256xf32, #tpu.memory_space<vmem>>, vector<1x8x256xf32>
      %18 = vector.shape_cast %17 : vector<1x8x256xf32> to vector<8x256xf32>
      %19 = vector.shape_cast %16 : vector<8x256xf32> to vector<1x8x256xf32>
      tpu.vector_store %arg5[%c0_10, %c0_11, %c0_12], %19 {strides = array<i32>} : memref<1x8x256xf32, #tpu.memory_space<vmem>>, vector<1x8x256xf32>,
    } else {
    }
    return
  }
  func.func @transform_0(%arg0: i32, %arg1: i32) -> (i32, i32) {
    %c0_i32 = arith.constant 0 : i32
    %c0_i32_0 = arith.constant 0 : i32
    %c0_i32_1 = arith.constant 0 : i32
    return %c0_i32, %c0_i32_0 : i32, i32
  }
  func.func @transform_1(%arg0: i32, %arg1: i32) -> (i32, i32, i32) {
    %c1_i32 = arith.constant 1 : i32
    %0 = arith.cmpi slt, %arg1, %c1_i32 : i32
    %c1_i32_0 = arith.constant 1 : i32
    %1 = arith.subi %arg1, %c1_i32_0 : i32
    %2 = arith.select %0, %arg1, %1 : i32
    %c0_i32 = arith.constant 0 : i32
    %c0_i32_1 = arith.constant 0 : i32
    return %arg0, %c0_i32, %2 : i32, i32, i32
  }
  func.func @transform_2(%arg0: i32, %arg1: i32) -> (i32, i32, i32) {
    %c0_i32 = arith.constant 0 : i32
    %c0_i32_0 = arith.constant 0 : i32
    %c0_i32_1 = arith.constant 0 : i32
    return %arg0, %c0_i32, %c0_i32_0 : i32, i32, i32
  }
  func.func @transform_3(%arg0: i32, %arg1: i32) -> (i32, i32, i32) {
    %c1_i32 = arith.constant 1 : i32
    %0 = arith.cmpi slt, %arg1, %c1_i32 : i32
    %c1_i32_0 = arith.constant 1 : i32
    %1 = arith.subi %arg1, %c1_i32_0 : i32
    %c0_i32 = arith.constant 0 : i32
    %2 = arith.select %0, %c0_i32, %1 : i32
    %c0_i32_1 = arith.constant 0 : i32
    %c0_i32_2 = arith.constant 0 : i32
    return %arg0, %c0_i32_1, %2 : i32, i32, i32
  }
}

</mosaic_0001>

<llo_original>
// kernel: tpu_custom_call.1
$region0: #{tpu_custom_call.1}
  #allocation0 [shape = 'u32[]', space=smem, size = 0x4, offset = 0x4, fixed_abs, tag = 'smem constant byte address 0x4 - core index']
  #allocation1 [shape = 'u32[144,128]{1,0:T(1,128)}', space=vmem, size = 0x12000, scoped, tag = 'internal scratch']
  #allocation2 [shape = 'f32[8,1]{1,0:T(8,128)}', space=vmem, size = 0x1000, scoped, tag = 'scratch operand']
  #allocation3 [shape = 'f32[8,8]{1,0:T(8,128)}', space=vmem, size = 0x1000, scoped, tag = 'scratch operand']
  #allocation4 [shape = 'f32[1,1]{1,0:T(1,128)S(6)}', space=smem, size = 0x200, scoped, tag = 'scoped memory for tpu_custom_call.1']
  %s0 = inlined_call_operand.<no memory space> [shape: f32[1,1], index: 0, kind: input, shape index: {}]
  %s1 = inlined_call_operand.hbm [shape: f32[2,8,256], index: 1, kind: input, shape index: {}]
  %s2 = inlined_call_operand.vmem [shape: f32[2,1,8], index: 2, kind: input, shape index: {}]
  %s3 = inlined_call_operand.hbm [shape: f32[2,8,256], index: 3, kind: output, shape index: {}]
  %s4 = sld [smem:[#allocation0]]
  $region65: #{tpu_custom_call.1} parent=0
    _
  %s6 = ssub.s32 1, %s4
  %s7 = scalar_select 0, %s6, %s4
  %8 = sst [smem:[#allocation4]] %s0
  $region1: #{tpu_custom_call.1} parent=0
    #allocation5 [shape = 'u8[16384]{0}', space=vmem, size = 0x4000, scoped, tag = 'input window, operand 1']
    #allocation6 [shape = 's32[2]{0}', space=sflag, size = 0x8, scoped, tag = 'scoped memory for tpu_custom_call.1']
    #allocation7 [shape = 's32[2]{0}', space=sflag, size = 0x8, scoped, tag = 'scoped memory for tpu_custom_call.1']
    #allocation8 [shape = 'u8[16384]{0}', space=vmem, size = 0x4000, scoped, tag = 'output window, operand 0']
    %9 = vsyncpa [#allocation6], 0
    %s10 = scalar_lea.sflag [#allocation6], 1
    %11 = vsyncpa %s10, 0
    %12 = vsyncpa [#allocation7], 0
    %s13 = scalar_lea.sflag [#allocation7], 1
    %14 = vsyncpa %s13, 0
    loop: start=0, step=1, limit=6
    $region2: #{tpu_custom_call.1} parent=1 // loop_pre_header
      _
    $region3: #{tpu_custom_call.1} parent=1 // loop_header
      %s16 = sphi 0, %s20
      %p17 = scmp.ge.s32.totalorder %s16, 6
      %s23 = sphi 0, %s35
      %s24 = sphi 0, %s31
      %s25 = sphi 0, %s23
      %s26 = sphi 0, %s24
      %s27 = sphi 0, %s25
      %s28 = sphi 0, %s26
      %s36 = sphi 0, %s36
      %s38 = sphi 0, %s36
      %s39 = sphi 0, %s38
      %s53 = sphi 0, %s39
      %s67 = sphi 0, %s69
      %s70 = sphi 0, %s67
      %s71 = sphi 0, %s70
      %s87 = sphi 0, %s71
      %s93 = sphi 0, %s95
      %s96 = sphi 0, %s93
      %s97 = sphi 0, %s96
      %s113 = sphi 0, %s97
      %s127 = sphi 0, %s129
      %s130 = sphi 0, %s127
      %s131 = sphi 0, %s130
      %s147 = sphi 0, %s131
    $region4: #{tpu_custom_call.1} parent=1 // loop_header_branch
      %19 = sbr.rel (%p17) target = $region8
    $region5: #{tpu_custom_call.1} parent=1 // loop_body
      %s21 = ssub.s32 %s16, 1
      %s22 = ssub.s32 %s16, 2
      %s29 = sadd.s32 1, %s24
      %p30 = scmp.ge.s32.totalorder %s29, 2
      %s31 = scalar_select %p30, 0, %s29
      %s32 = sadd.s32 1, %s23
      %s33 = scalar_select %p30, %s32, %s23
      %p34 = scmp.ge.s32.totalorder %s33, 2
      %s35 = scalar_select %p34, 0, %s33
      %s37 = sadd.s32 %s36, 1
      %p40 = scmp.eq.s32.totalorder %s16, 3
      %p41 = scmp.ne.s32.totalorder %s36, %s38
      %p42 = scmp.eq.s32.totalorder %s16, 0
      %p43 = por %p41, %p42
      %p44 = scmp.ne.s32.totalorder %s36, %s38
      %p45 = scmp.eq.s32.totalorder %s21, 3
      %p46 = por %p44, %p45
      %p47 = scmp.ne.s32.totalorder %s38, %s39
      %p48 = scmp.eq.s32.totalorder %s21, 0
      %p49 = por %p47, %p48
      %p50 = scmp.ne.s32.totalorder %s38, %s39
      %p51 = scmp.eq.s32.totalorder %s22, 3
      %p52 = por %p50, %p51
      %p54 = scmp.ne.s32.totalorder %s39, %s53
      %p55 = scmp.eq.s32.totalorder %s22, 0
      %p56 = por %p54, %p55
      %p57 = scmp.lt.s32.totalorder %s24, 1
      %s58 = ssub.s32 %s24, 1
      %s59 = scalar_select %p57, %s24, %s58
      %p60 = scmp.lt.s32.totalorder %s31, 1
      %s61 = ssub.s32 %s31, 1
      %s62 = scalar_select %p60, %s31, %s61
      %s63 = ssub.s32 %s23, %s35
      %s64 = ssub.s32 %s59, %s62
      %s65 = sor.u32 %s63, %s64
      %p66 = scmp.eq.s32.totalorder %s65, 0
      %s68 = sadd.s32 %s67, 1
      %s69 = scalar_select %p66, %s67, %s68
      %p72 = pneg %p66
      %p73 = scmp.eq.s32.totalorder %s16, 3
      %p74 = por %p72, %p73
      %p75 = scmp.ne.s32.totalorder %s67, %s70
      %p76 = scmp.eq.s32.totalorder %s16, 0
      %p77 = por %p75, %p76
      %p78 = scmp.ne.s32.totalorder %s67, %s70
      %p79 = scmp.eq.s32.totalorder %s21, 3
      %p80 = por %p78, %p79
      %p81 = scmp.ne.s32.totalorder %s70, %s71
      %p82 = scmp.eq.s32.totalorder %s21, 0
      %p83 = por %p81, %p82
      %p84 = scmp.ne.s32.totalorder %s70, %s71
      %p85 = scmp.eq.s32.totalorder %s22, 3
      %p86 = por %p84, %p85
      %p88 = scmp.ne.s32.totalorder %s71, %s87
      %p89 = scmp.eq.s32.totalorder %s22, 0
      %p90 = por %p88, %p89
      %s91 = ssub.s32 %s23, %s35
      %p92 = scmp.eq.s32.totalorder %s91, 0
      %s94 = sadd.s32 %s93, 1
      %s95 = scalar_select %p92, %s93, %s94
      %p98 = pneg %p92
      %p99 = scmp.eq.s32.totalorder %s16, 3
      %p100 = por %p98, %p99
      %p101 = scmp.ne.s32.totalorder %s93, %s96
      %p102 = scmp.eq.s32.totalorder %s16, 0
      %p103 = por %p101, %p102
      %p104 = scmp.ne.s32.totalorder %s93, %s96
      %p105 = scmp.eq.s32.totalorder %s21, 3
      %p106 = por %p104, %p105
      %p107 = scmp.ne.s32.totalorder %s96, %s97
      %p108 = scmp.eq.s32.totalorder %s21, 0
      %p109 = por %p107, %p108
      %p110 = scmp.ne.s32.totalorder %s96, %s97
      %p111 = scmp.eq.s32.totalorder %s22, 3
      %p112 = por %p110, %p111
      %p114 = scmp.ne.s32.totalorder %s97, %s113
      %p115 = scmp.eq.s32.totalorder %s22, 0
      %p116 = por %p114, %p115
      %p117 = scmp.lt.s32.totalorder %s24, 1
      %s118 = ssub.s32 %s24, 1
      %s119 = scalar_select %p117, 0, %s118
      %p120 = scmp.lt.s32.totalorder %s31, 1
      %s121 = ssub.s32 %s31, 1
      %s122 = scalar_select %p120, 0, %s121
      %s123 = ssub.s32 %s23, %s35
      %s124 = ssub.s32 %s119, %s122
      %s125 = sor.u32 %s123, %s124
      %p126 = scmp.eq.s32.totalorder %s125, 0
      %s128 = sadd.s32 %s127, 1
      %s129 = scalar_select %p126, %s127, %s128
      %p132 = pneg %p126
      %p133 = scmp.eq.s32.totalorder %s16, 3
      %p134 = por %p132, %p133
      %p135 = scmp.ne.s32.totalorder %s127, %s130
      %p136 = scmp.eq.s32.totalorder %s16, 0
      %p137 = por %p135, %p136
      %p138 = scmp.ne.s32.totalorder %s127, %s130
      %p139 = scmp.eq.s32.totalorder %s21, 3
      %p140 = por %p138, %p139
      %p141 = scmp.ne.s32.totalorder %s130, %s131
      %p142 = scmp.eq.s32.totalorder %s21, 0
      %p143 = por %p141, %p142
      %p144 = scmp.ne.s32.totalorder %s130, %s131
      %p145 = scmp.eq.s32.totalorder %s22, 3
      %p146 = por %p144, %p145
      %p148 = scmp.ne.s32.totalorder %s131, %s147
      %p149 = scmp.eq.s32.totalorder %s22, 0
      %p150 = por %p148, %p149
      %p151 = scmp.le.s32.totalorder 1, %s16
      %p152 = scmp.lt.s32.totalorder %s16, 5
      %p153 = pnand %p151, %p152
      %p154 = pneg %p153
      // Predicated region
      $region9: #{tpu_custom_call.1} parent=5 // pred_check
        _
      $region10: #{tpu_custom_call.1} parent=5 // pred_check_branch
        %156 = sbr.rel (%p153) target = $region12
      $region11: #{tpu_custom_call.1} parent=5 // pred_region
        %s157 = ssub.s32 %s16, 1
        // Predicated region
        $region13: #{tpu_custom_call.1} parent=11 // pred_check
          %p158 = pneg %p49
        $region14: #{tpu_custom_call.1} parent=11 // pred_check_branch
          %160 = sbr.rel (%p158) target = $region16
        $region15: #{tpu_custom_call.1} parent=11 // pred_region
          _
        $region16: #{tpu_custom_call.1} parent=11 // pred_fallthru
          _
      $region12: #{tpu_custom_call.1} parent=5 // pred_fallthru
        _
      %p161 = scmp.lt.s32.totalorder %s16, 4
      // Predicated region
      $region17: #{tpu_custom_call.1} parent=5 // pred_check
        %p162 = pneg %p161
      $region18: #{tpu_custom_call.1} parent=5 // pred_check_branch
        %164 = sbr.rel (%p162) target = $region20
      $region19: #{tpu_custom_call.1} parent=5 // pred_region
        // Predicated region
        $region21: #{tpu_custom_call.1} parent=19 // pred_check
          %p165 = pneg %p77
        $region22: #{tpu_custom_call.1} parent=19 // pred_check_branch
          %167 = sbr.rel (%p165) target = $region24
        $region23: #{tpu_custom_call.1} parent=19 // pred_region
          %s168 = sand.u32 %s67, 1
          %s169 = scalar_lea.sflag [#allocation6], %s168
          %s170 = sand.u32 %s67, 1
          %s171 = smul.addr %s170, 16
          %s172 = scalar_lea.vmem [#allocation5], %s171
          %p173 = scmp.lt.s32.totalorder %s24, 1
          %s174 = ssub.s32 %s24, 1
          %s175 = scalar_select %p173, %s24, %s174
          %s176 = smul.u32 2, %s175
          %s178 = ssub.s32 256, 256
          %179 = vsyncadd %s169, %s178
          %s180 = smul.addr %s23, 2
          %s181 = sadd.s32 %s176, %s180
          %s182 = smul.addr %s181, 128
          %s183 = scalar_lea.hbm %s1, %s182
          %s185 = sshll.u32 %s172, 4
          %s186 = int_to_ptr.vmem [resolvable:$true] %s185
          %188 = dma.hbm_to_vmem [thread:$0]  %s183, 256, %s186, %s169
        $region24: #{tpu_custom_call.1} parent=19 // pred_fallthru
          _
        // Predicated region
        $region25: #{tpu_custom_call.1} parent=19 // pred_check
          %p189 = pneg %p103
        $region26: #{tpu_custom_call.1} parent=19 // pred_check_branch
          %191 = sbr.rel (%p189) target = $region28
        $region27: #{tpu_custom_call.1} parent=19 // pred_region
          %p192 = scmp.lt.s32.totalorder %s23, 1
          %s193 = scalar_select %p192, %s23, 1
          %s194 = scalar_lea.vmem %s2, %s193
        $region28: #{tpu_custom_call.1} parent=19 // pred_fallthru
          _
      $region20: #{tpu_custom_call.1} parent=5 // pred_fallthru
        _
      %p195 = scmp.le.s32.totalorder 1, %s16
      %p196 = scmp.lt.s32.totalorder %s16, 5
      %p197 = pnand %p195, %p196
      %p198 = pneg %p197
      // Predicated region
      $region29: #{tpu_custom_call.1} parent=5 // pred_check
        _
      $region30: #{tpu_custom_call.1} parent=5 // pred_check_branch
        %200 = sbr.rel (%p197) target = $region32
      $region31: #{tpu_custom_call.1} parent=5 // pred_region
        %s201 = ssub.s32 %s16, 1
        %s202 = sand.u32 %s70, 1
        %s203 = scalar_lea.sflag [#allocation6], %s202
        %s204 = sand.u32 %s70, 1
        %s205 = smul.addr %s204, 16
        %s206 = scalar_lea.vmem [#allocation5], %s205
        // Predicated region
        $region33: #{tpu_custom_call.1} parent=31 // pred_check
          %p207 = pneg %p83
        $region34: #{tpu_custom_call.1} parent=31 // pred_check_branch
          %209 = sbr.rel (%p207) target = $region36
        $region35: #{tpu_custom_call.1} parent=31 // pred_region
          %210 = dma.done %s203, 256
        $region36: #{tpu_custom_call.1} parent=31 // pred_fallthru
          _
        %p211 = pneg %p49
        %p212 = pneg %p46
        %s213 = sand.u32 %s70, 1
        %s214 = scalar_lea.sflag [#allocation6], %s213
        %s215 = sand.u32 %s70, 1
        %s216 = smul.addr %s215, 16
        %s217 = scalar_lea.vmem [#allocation5], %s216
        %p218 = pneg %p83
        %p219 = pneg %p80
        %p220 = scmp.lt.s32.totalorder %s25, 1
        %s221 = scalar_select %p220, %s25, 1
        %s222 = scalar_lea.vmem %s2, %s221
        %p223 = pneg %p109
        %p224 = pneg %p106
        %p225 = pneg %p143
        %p226 = pneg %p140
        %s227 = sand.u32 %s130, 1
        %s228 = scalar_lea.sflag [#allocation7], %s227
        %s229 = sand.u32 %s130, 1
        %s230 = smul.addr %s229, 16
        %s231 = scalar_lea.vmem [#allocation8], %s230
        %p232 = scmp.lt.s32.totalorder %s26, 1
        %s233 = ssub.s32 %s26, 1
        %s234 = scalar_select %p232, %s26, %s233
        %s235 = smul.u32 2, %s234
        %p236 = scmp.lt.s32.totalorder %s25, 1
        %s237 = scalar_select %p236, %s25, 1
        %s238 = scalar_lea.vmem %s2, %s237
        %p239 = scmp.lt.s32.totalorder %s26, 1
        %s240 = ssub.s32 %s26, 1
        %s241 = scalar_select %p239, 0, %s240
        %s242 = smul.u32 2, %s241
        %v243 = vld [vmem:[%s206] sm:$0xff]
        %v244 = vld [vmem:[%s206 + $0x8] sm:$0xff]
        %p245 = scmp.eq.s32.totalorder %s26, 0
        // Predicated region
        $region37: #{tpu_custom_call.1} parent=31 // pred_check
          %p246 = pneg %p245
        $region38: #{tpu_custom_call.1} parent=31 // pred_check_branch
          %248 = sbr.rel (%p246) target = $region40
        $region39: #{tpu_custom_call.1} parent=31 // pred_region
          %vm249 = vcmask 7168
          %250 = vst.msk [vmem:[#allocation2] sm:$0xff] %vm249, 0.0
        $region40: #{tpu_custom_call.1} parent=31 // pred_fallthru
          _
        %p251 = scmp.lt.s32.totalorder %s26, 1
        // Predicated region
        $region41: #{tpu_custom_call.1} parent=31 // pred_check
          %p252 = pneg %p251
        $region42: #{tpu_custom_call.1} parent=31 // pred_check_branch
          %254 = sbr.rel (%p252) target = $region44
        $region43: #{tpu_custom_call.1} parent=31 // pred_region
          %v255 = vld [vmem:[#allocation2] sm:$0xff]
          %v256 = vadd.f32 %v243, %v244
          %257 = vadd.xlane.f32.xlu0 %v256
          %v258 = vpop.xlane.xlu0 %257
          %v259 = vadd.f32 %v255, %v258
          %vm260 = vcmask 7168
          %261 = vst.msk [vmem:[#allocation2] sm:$0xff] %vm260, %v259
        $region44: #{tpu_custom_call.1} parent=31 // pred_fallthru
          _
        %p262 = scmp.eq.s32.totalorder %s26, 1
        // Predicated region
        $region45: #{tpu_custom_call.1} parent=31 // pred_check
          %p263 = pneg %p262
        $region46: #{tpu_custom_call.1} parent=31 // pred_check_branch
          %265 = sbr.rel (%p263) target = $region48
        $region47: #{tpu_custom_call.1} parent=31 // pred_region
          %v266 = vld [vmem:[%s238] sm:$0x1]
          %s267 = sld [smem:[#allocation4]]
          %v268 = vld [vmem:[#allocation2] sm:$0xff]
          %270 = vset.pattern.permute.xlu0 0
          %271 = vperm.xlu0 %270, %v268
          %v272 = vpop.permute.xlu0 %271
          %v275 = vlaneseq
          %v276 = vshrl.u32 %v275, 7
          %v277 = vsub.s32 0, %v276
          %v278 = vrot.slane %v266, %v277
          %v280 = vmul.f32 %v272, %v278
          %vm281 = vcmask 64512
          %v282 = vsel %vm281, %v280, inf
          %283 = vmin.xlane.f32.xlu0 %v282
          %v284 = vpop.xlane.xlu0 %283
          %v285 = vsub.f32 %v284, %v280
          %v286 = vmul.f32 %v285, 1.442695
          %v287 = vpow.pop %v286
          %v288 = vsel %vm281, %v287, 0.0
          %289 = vadd.xlane.f32.xlu0 %v288
          %v290 = vpop.xlane.xlu0 %289
          %v291 = vrcp.pop %v290
          %v292 = vmul.f32 %v287, %v291
          %v293 = vstv %s267
          %v294 = vmul.f32 %v293, %v292
          %295 = vst.msk [vmem:[#allocation3] sm:$0xff] %vm281, %v294
        $region48: #{tpu_custom_call.1} parent=31 // pred_fallthru
          _
        %p296 = scmp.ge.s32.totalorder %s26, 1
        // Predicated region
        $region49: #{tpu_custom_call.1} parent=31 // pred_check
          %p297 = pneg %p296
        $region50: #{tpu_custom_call.1} parent=31 // pred_check_branch
          %299 = sbr.rel (%p297) target = $region52
        $region51: #{tpu_custom_call.1} parent=31 // pred_region
          %v300 = vld [vmem:[#allocation3] sm:$0xff]
          %vm301 = vcmask 64512
          %v303 = vsel %vm301, %v300, 0
          %305 = vmatprep.subr.mxu0 %v244
          %306 = vmatpush1.msra.mxu0 %v243
          %307 = vmatprep.subr.mxu0 0.0
          %308 = vmatpush1.msra.mxu0 0.0
          %309 = vmatprep.subr.mxu0 0.0
          %310 = vmatpush1.msra.mxu0 0.0
          %311 = vmatprep.subr.mxu0 0.0
          %312 = vmatpush1.msra.mxu0 0.0
          %313 = vmatprep.subr.mxu0 0.0
          %314 = vmatpush1.msra.mxu0 0.0
          %315 = vmatprep.subr.mxu0 0.0
          %316 = vmatpush1.msra.mxu0 0.0
          %317 = vmatprep.subr.mxu0 0.0
          %318 = vmatpush1.msra.mxu0 0.0
          %319 = vmatprep.subr.mxu0 0.0
          %320 = vmatpush1.msra.mxu0 0.0
          %321 = vmatprep.subr.mxu0 0.0
          %322 = vmatpush1.msra.mxu0 0.0
          %323 = vmatprep.subr.mxu0 0.0
          %324 = vmatpush1.msra.mxu0 0.0
          %325 = vmatprep.subr.mxu0 0.0
          %326 = vmatpush1.msra.mxu0 0.0
          %327 = vmatprep.subr.mxu0 0.0
          %328 = vmatpush1.msra.mxu0 0.0
          %329 = vmatprep.subr.mxu0 0.0
          %330 = vmatpush1.msra.mxu0 0.0
          %331 = vmatprep.subr.mxu0 0.0
          %332 = vmatpush1.msra.mxu0 0.0
          %333 = vmatprep.subr.mxu0 0.0
          %334 = vmatpush1.msra.mxu0 0.0
          %335 = vmatprep.subr.mxu0 0.0
          %336 = vmatpush1.msra.mxu0 0.0
          %337 = vmatprep.subr.mxu0 0.0
          %338 = vmatpush1.msra.mxu0 0.0
          %339 = vmatprep.subr.mxu0 0.0
          %340 = vmatpush1.msra.mxu0 0.0
          %341 = vmatprep.subr.mxu0 0.0
          %342 = vmatpush1.msra.mxu0 0.0
          %343 = vmatprep.subr.mxu0 0.0
          %344 = vmatpush1.msra.mxu0 0.0
          %345 = vmatprep.subr.mxu0 0.0
          %346 = vmatpush1.msra.mxu0 0.0
          %347 = vmatprep.subr.mxu0 0.0
          %348 = vmatpush1.msra.mxu0 0.0
          %349 = vmatprep.subr.mxu0 0.0
          %350 = vmatpush1.msra.mxu0 0.0
          %351 = vmatprep.subr.mxu0 0.0
          %352 = vmatpush1.msra.mxu0 0.0
          %353 = vmatprep.subr.mxu0 0.0
          %354 = vmatpush1.msra.mxu0 0.0
          %355 = vmatprep.subr.mxu0 0.0
          %356 = vmatpush1.msra.mxu0 0.0
          %357 = vmatprep.subr.mxu0 0.0
          %358 = vmatpush1.msra.mxu0 0.0
          %359 = vmatprep.subr.mxu0 0.0
          %360 = vmatpush1.msra.mxu0 0.0
          %361 = vmatprep.subr.mxu0 0.0
          %362 = vmatpush1.msra.mxu0 0.0
          %363 = vmatprep.subr.mxu0 0.0
          %364 = vmatpush1.msra.mxu0 0.0
          %365 = vmatprep.subr.mxu0 0.0
          %366 = vmatpush1.msra.mxu0 0.0
          %367 = vmatprep.subr.mxu0 0.0
          %368 = vmatpush1.msra.mxu0 0.0
          %369 = vmatprep.mubr.f32.mxu0 0.0
          %370 = vmatmul.mubr.f32.gmra.mrb[0].mxu0 %v303
          %v371 = vpop.f32.mrb[0].mxu0
          %v372 = vadd.f32 %v243, %v371
          %v373 = vpop.f32.mrb[0].mxu0
          %v374 = vadd.f32 %v244, %v373
          %375 = vdwg.mxu0
          %376 = vst [vmem:[%s231] sm:$0xff] %v372
          %377 = vst [vmem:[%s231 + $0x8] sm:$0xff] %v374
        $region52: #{tpu_custom_call.1} parent=31 // pred_fallthru
          _
        %s378 = sand.u32 %s130, 1
        %s379 = scalar_lea.sflag [#allocation7], %s378
        %s380 = sand.u32 %s130, 1
        %s381 = smul.addr %s380, 16
        %s382 = scalar_lea.vmem [#allocation8], %s381
        // Predicated region
        $region53: #{tpu_custom_call.1} parent=31 // pred_check
          %p383 = pneg %p140
        $region54: #{tpu_custom_call.1} parent=31 // pred_check_branch
          %385 = sbr.rel (%p383) target = $region56
        $region55: #{tpu_custom_call.1} parent=31 // pred_region
          %p386 = scmp.lt.s32.totalorder %s26, 1
          %s387 = ssub.s32 %s26, 1
          %s388 = scalar_select %p386, 0, %s387
          %s389 = smul.u32 2, %s388
          %s391 = ssub.s32 256, 256
          %392 = vsyncadd %s379, %s391
          %s393 = smul.addr %s25, 2
          %s394 = sadd.s32 %s389, %s393
          %s395 = smul.addr %s394, 128
          %s396 = scalar_lea.hbm %s3, %s395
          %s398 = sshll.u32 %s382, 4
          %s399 = int_to_ptr.vmem [resolvable:$true] %s398
          %401 = dma.vmem_to_hbm [thread:$0]  %s399, 256, %s396, %s379
        $region56: #{tpu_custom_call.1} parent=31 // pred_fallthru
          _
      $region32: #{tpu_custom_call.1} parent=5 // pred_fallthru
        _
      %p402 = scmp.le.s32.totalorder 2, %s16
      // Predicated region
      $region57: #{tpu_custom_call.1} parent=5 // pred_check
        %p403 = pneg %p402
      $region58: #{tpu_custom_call.1} parent=5 // pred_check_branch
        %405 = sbr.rel (%p403) target = $region60
      $region59: #{tpu_custom_call.1} parent=5 // pred_region
        %s406 = ssub.s32 %s16, 2
        // Predicated region
        $region61: #{tpu_custom_call.1} parent=59 // pred_check
          %p407 = pneg %p146
        $region62: #{tpu_custom_call.1} parent=59 // pred_check_branch
          %409 = sbr.rel (%p407) target = $region64
        $region63: #{tpu_custom_call.1} parent=59 // pred_region
          %s410 = sand.u32 %s131, 1
          %s411 = scalar_lea.sflag [#allocation7], %s410
          %s412 = sand.u32 %s131, 1
          %s413 = smul.addr %s412, 16
          %s414 = scalar_lea.vmem [#allocation8], %s413
          %415 = dma.done %s411, 256
        $region64: #{tpu_custom_call.1} parent=59 // pred_fallthru
          _
      $region60: #{tpu_custom_call.1} parent=5 // pred_fallthru
        _
    $region6: #{tpu_custom_call.1} parent=1 // loop_footer
      %s20 = sadd.s32 1, %s16
    $region7: #{tpu_custom_call.1} parent=1 // loop_footer_branch
      %15 = sbr.rel target = $region3
    $region8: #{tpu_custom_call.1} parent=1 // loop_exit
      _
    %416 = vsyncpa [#allocation6], 1
    %s417 = scalar_lea.sflag [#allocation6], 1
    %418 = vsyncpa %s417, 1
    %419 = vsyncpa [#allocation7], 1
    %s420 = scalar_lea.sflag [#allocation7], 1
    %421 = vsyncpa %s420, 1

</llo_original>
